<compile_context>
chip_gen: v6e
topology: v6e:2x2x1
jax: 0.10.0
libtpu: 0.0.40
codegen_flags: <defaults>
</compile_context>

<pallas_src>
import functools

import jax
import jax.numpy as jnp
from jax import lax
from jax.experimental import pallas as pl
from jax.experimental.pallas import tpu as pltpu

ORIG_DIM = 32     # channels of both orig and trg
ATTN_DIM = 32     # attention dim
SCALE = ATTN_DIM ** (-0.5)


def _cross_attn_kernel(x_ref, w3_ref, b3_ref, out_ref, *, B, N, A):
    """Single-step kernel (no grid).

    x_ref  : (C, B*N + N)  columns = [trg tokens, batch-major | orig tokens]  (tokens on lanes)
    w3_ref : (3A, C)       rows    = [Wq | Wk | Wv]  (PyTorch (out, in) layout)
    b3_ref : (3A, 1)
    out_ref: (B, A)
    """
    BN = B * N

    # One fused projection on the MXU: q for every trg token and k/v for the
    # shared orig tokens all come out of a single (3A, C) @ (C, BN + N) matmul.
    y = jnp.dot(w3_ref[...], x_ref[...],
                preferred_element_type=jnp.float32) + b3_ref[...]   # (3A, BN+N)

    kT = y[A:2 * A, BN:]        # (A, N)  k (computed once), tokens on lanes
    vT = y[2 * A:3 * A, BN:]    # (A, N)  v (computed once), tokens on lanes

    ps, invs = [], []
    for b in range(B):          # tiny static unroll (B=2): no grid-step overhead
        qT = y[0:A, b * N:(b + 1) * N]                           # (A, N)
        # per-token dot q.k -> lane-major scores
        s = jnp.sum(qT * kT, axis=0, keepdims=True) * SCALE      # (1, N)
        # softmax over tokens: every reduction is along the lane axis
        m = jnp.max(s, axis=-1, keepdims=True)                   # (1, 1)
        p = jnp.exp(s - m)                                       # (1, N)
        denom = jnp.sum(p, axis=-1, keepdims=True)               # (1, 1)
        ps.append(p)
        invs.append(pl.reciprocal(denom, approx=True))           # EUP vrcp

    p_all = jnp.concatenate(ps, axis=0)                          # (B, N)
    inv_all = jnp.concatenate(invs, axis=0)                      # (B, 1)

    # Weighted sum of v as an MXU contraction over the token axis:
    #   out[b, a] = sum_n p[b, n] * v[n, a]
    out = lax.dot_general(p_all, vT, (((1,), (1,)), ((), ())),
                          preferred_element_type=jnp.float32)    # (B, A)

    # Single lane-dense store of the full (B, A) output.
    out_ref[...] = (out * inv_all).astype(out_ref.dtype)


def cross_attention_block(orig_nchw, trg_nchw, wq, bq, wk, bk, wv, bv):
    """orig_nchw: (1, C, h, w); trg_nchw: (B, C, Ht, Wt) with Ht*Wt == h*w."""
    B, C, Ht, Wt = trg_nchw.shape
    Bo, Co, h, w = orig_nchw.shape
    assert Bo == 1 and Co == C and Ht * Wt == h * w
    N = Ht * Wt
    A = wq.shape[0]

    # Token-on-lanes layout: X[c, t] with t = [trg tokens (batch-major) | orig tokens].
    trgT = trg_nchw.reshape(B, C, N).transpose(1, 0, 2).reshape(C, B * N)
    origT = orig_nchw.reshape(C, N)
    x = jnp.concatenate([trgT, origT], axis=1)                   # (C, B*N + N)

    # Fused projection params (PyTorch Linear weight layout is (out, in)).
    w3 = jnp.concatenate([wq, wk, wv], axis=0)                   # (3A, C)
    b3 = jnp.concatenate([bq, bk, bv]).reshape(3 * A, 1)         # (3A, 1)

    kernel = functools.partial(_cross_attn_kernel, B=B, N=N, A=A)
    vmem = pl.BlockSpec(memory_space=pltpu.MemorySpace.VMEM)

    # Whole problem (<100 KB) fits in VMEM on every generation: one ungridded
    # invocation, no pipelining machinery, no per-grid-step overhead.
    return pl.pallas_call(
        kernel,
        out_shape=jax.ShapeDtypeStruct((B, A), jnp.float32),
        in_specs=[vmem, vmem, vmem],
        out_specs=vmem,
    )(x, w3, b3)


def reference(orig_nchw, trg_nchw, wq, bq, wk, bk, wv, bv):
    """Pure-JAX transcription of the PyTorch forward, for verification."""
    B, C, Ht, Wt = trg_nchw.shape
    A = wq.shape[0]
    q = jnp.transpose(trg_nchw, (0, 2, 3, 1)) @ wq.T + bq        # (B, Ht, Wt, A)
    k = jnp.transpose(orig_nchw, (0, 2, 3, 1)) @ wk.T + bk       # (1, h, w, A)
    v = jnp.transpose(orig_nchw, (0, 2, 3, 1)) @ wv.T + bv
    qf = q.reshape(B, -1, A)
    kf = k.reshape(1, -1, A)
    attn = jnp.sum(qf * kf, axis=-1) * SCALE                     # (B, N)
    sm = jax.nn.softmax(attn.reshape(B, -1), axis=1).reshape(attn.shape)
    out = sm[:, :, None] * v.reshape(1, -1, A)                   # (B, N, A)
    return out.sum(axis=1)                                       # (B, A)


if __name__ == "__main__":
    key = jax.random.PRNGKey(0)
    k_orig, k_trg, kq_w, kq_b, kk_w, kk_b, kv_w, kv_b = jax.random.split(key, 8)

    B, C, H, W = 2, ORIG_DIM, 8, 8            # trg: (2, 32, 8, 8), orig: (1, 32, 8, 8)
    orig = jax.random.normal(k_orig, (1, C, H, W), dtype=jnp.float32)
    trg = jax.random.normal(k_trg, (B, C, H, W), dtype=jnp.float32)

    # deterministic "Linear" params, PyTorch convention: weight (out_dim, in_dim)
    A = ATTN_DIM
    wq = jax.random.normal(kq_w, (A, C), dtype=jnp.float32) * 0.05
    bq = jax.random.normal(kq_b, (A,), dtype=jnp.float32) * 0.05
    wk = jax.random.normal(kk_w, (A, C), dtype=jnp.float32) * 0.05
    bk = jax.random.normal(kk_b, (A,), dtype=jnp.float32) * 0.05
    wv = jax.random.normal(kv_w, (A, C), dtype=jnp.float32) * 0.05
    bv = jax.random.normal(kv_b, (A,), dtype=jnp.float32) * 0.05

    fn = jax.jit(cross_attention_block)
    out = jax.block_until_ready(fn(orig, trg, wq, bq, wk, bk, wv, bv))

    ref = reference(orig, trg, wq, bq, wk, bk, wv, bv)
    assert out.shape == (B, A), out.shape
    max_err = float(jnp.max(jnp.abs(out - ref)))
    assert jnp.allclose(out, ref, atol=2e-4, rtol=2e-4), f"max abs err {max_err}"

    print("KERNEL_OK")
</pallas_src>

<mosaic_0001>
module attributes {stable_mosaic.version = 11 : i64} {
  func.func @_cross_attn_kernel(%arg0: memref<32x192xf32, #tpu.memory_space<vmem>>, %arg1: memref<96x32xf32, #tpu.memory_space<vmem>>, %arg2: memref<96x1xf32, #tpu.memory_space<vmem>>, %arg3: memref<2x32xf32, #tpu.memory_space<vmem>>) attributes {dimension_semantics = [], scalar_prefetch = 0 : i64, scratch_operands = 0 : i64, tpu.core_type = #tpu.core_type<tc>} {
    %c0 = arith.constant 0 : index
    %c0_0 = arith.constant 0 : index
    %0 = vector.load %arg1[%c0, %c0_0] : memref<96x32xf32, #tpu.memory_space<vmem>>, vector<96x32xf32>
    %c0_1 = arith.constant 0 : index
    %c0_2 = arith.constant 0 : index
    %1 = vector.load %arg0[%c0_1, %c0_2] : memref<32x192xf32, #tpu.memory_space<vmem>>, vector<32x192xf32>
    %cst = arith.constant dense<0.000000e+00> : vector<96x192xf32>
    %2 = tpu.matmul %0, %1, %cst {dimension_numbers = #tpu.dot_dimension_numbers<[1], [0], [0], [1], [0, 0, 1, 1], [], []>} : vector<96x32xf32>, vector<32x192xf32>, vector<96x192xf32> -> vector<96x192xf32>
    %c0_3 = arith.constant 0 : index
    %c0_4 = arith.constant 0 : index
    %3 = vector.load %arg2[%c0_3, %c0_4] : memref<96x1xf32, #tpu.memory_space<vmem>>, vector<96x1xf32>
    %4 = vector.broadcast %3 : vector<96x1xf32> to vector<96x192xf32>
    %5 = arith.addf %2, %4 : vector<96x192xf32>
    %6 = vector.extract_strided_slice %5 {offsets = [32, 128], sizes = [32, 64], strides = [1, 1]} : vector<96x192xf32> to vector<32x64xf32>
    %7 = vector.extract_strided_slice %5 {offsets = [64, 128], sizes = [32, 64], strides = [1, 1]} : vector<96x192xf32> to vector<32x64xf32>
    %8 = vector.extract_strided_slice %5 {offsets = [0, 0], sizes = [32, 64], strides = [1, 1]} : vector<96x192xf32> to vector<32x64xf32>
    %9 = arith.mulf %8, %6 : vector<32x64xf32>
    %cst_5 = arith.constant dense<0.000000e+00> : vector<64xf32>
    %10 = vector.multi_reduction <add>, %9, %cst_5 [0] : vector<32x64xf32> to vector<64xf32>
    %11 = vector.shape_cast %10 : vector<64xf32> to vector<1x64xf32>
    %cst_6 = arith.constant 0.176776692 : f32
    %12 = vector.broadcast %cst_6 : f32 to vector<1x64xf32>
    %13 = arith.mulf %11, %12 : vector<1x64xf32>
    %cst_7 = arith.constant dense<0xFF800000> : vector<1xf32>
    %14 = vector.multi_reduction <maximumf>, %13, %cst_7 [1] : vector<1x64xf32> to vector<1xf32>
    %15 = vector.shape_cast %14 : vector<1xf32> to vector<1x1xf32>
    %16 = vector.broadcast %15 : vector<1x1xf32> to vector<1x64xf32>
    %17 = arith.subf %13, %16 : vector<1x64xf32>
    %18 = math.exp %17 : vector<1x64xf32>
    %cst_8 = arith.constant dense<0.000000e+00> : vector<1xf32>
    %19 = vector.multi_reduction <add>, %18, %cst_8 [1] : vector<1x64xf32> to vector<1xf32>
    %20 = vector.shape_cast %19 : vector<1xf32> to vector<1x1xf32>
    %21 = tpu.reciprocal %20 {approx = true} : vector<1x1xf32> -> vector<1x1xf32>
    %22 = vector.extract_strided_slice %5 {offsets = [0, 64], sizes = [32, 64], strides = [1, 1]} : vector<96x192xf32> to vector<32x64xf32>
    %23 = arith.mulf %22, %6 : vector<32x64xf32>
    %cst_9 = arith.constant dense<0.000000e+00> : vector<64xf32>
    %24 = vector.multi_reduction <add>, %23, %cst_9 [0] : vector<32x64xf32> to vector<64xf32>
    %25 = vector.shape_cast %24 : vector<64xf32> to vector<1x64xf32>
    %cst_10 = arith.constant 0.176776692 : f32
    %26 = vector.broadcast %cst_10 : f32 to vector<1x64xf32>
    %27 = arith.mulf %25, %26 : vector<1x64xf32>
    %cst_11 = arith.constant dense<0xFF800000> : vector<1xf32>
    %28 = vector.multi_reduction <maximumf>, %27, %cst_11 [1] : vector<1x64xf32> to vector<1xf32>
    %29 = vector.shape_cast %28 : vector<1xf32> to vector<1x1xf32>
    %30 = vector.broadcast %29 : vector<1x1xf32> to vector<1x64xf32>
    %31 = arith.subf %27, %30 : vector<1x64xf32>
    %32 = math.exp %31 : vector<1x64xf32>
    %cst_12 = arith.constant dense<0.000000e+00> : vector<1xf32>
    %33 = vector.multi_reduction <add>, %32, %cst_12 [1] : vector<1x64xf32> to vector<1xf32>
    %34 = vector.shape_cast %33 : vector<1xf32> to vector<1x1xf32>
    %35 = tpu.reciprocal %34 {approx = true} : vector<1x1xf32> -> vector<1x1xf32>
    %36 = tpu.concatenate %18, %32 in 0 : vector<1x64xf32>, vector<1x64xf32> -> vector<2x64xf32>
    %37 = tpu.concatenate %21, %35 in 0 : vector<1x1xf32>, vector<1x1xf32> -> vector<2x1xf32>
    %cst_13 = arith.constant dense<0.000000e+00> : vector<2x32xf32>
    %38 = tpu.matmul %36, %7, %cst_13 {dimension_numbers = #tpu.dot_dimension_numbers<[1], [1], [0], [0], [0, 0, 1, 0], [], []>} : vector<2x64xf32>, vector<32x64xf32>, vector<2x32xf32> -> vector<2x32xf32>
    %39 = vector.broadcast %37 : vector<2x1xf32> to vector<2x32xf32>
    %40 = arith.mulf %38, %39 : vector<2x32xf32>
    %c0_14 = arith.constant 0 : index
    %c0_15 = arith.constant 0 : index
    %41 = vector.load %arg3[%c0_14, %c0_15] : memref<2x32xf32, #tpu.memory_space<vmem>>, vector<2x32xf32>
    tpu.vector_store %arg3[%c0_14, %c0_15], %40 {strides = array<i32>} : memref<2x32xf32, #tpu.memory_space<vmem>>, vector<2x32xf32>,
    return
  }
}

</mosaic_0001>

<llo_original>
// kernel: cross_attention_block.1
$region0: #{cross_attention_block.1}
  #allocation0 [shape = 'u32[]', space=smem, size = 0x4, offset = 0x4, fixed_abs, tag = 'smem constant byte address 0x4 - core index']
  #allocation1 [shape = 'u32[144,128]{1,0:T(1,128)}', space=vmem, size = 0x12000, scoped, tag = 'internal scratch']
  %s0 = inlined_call_operand.vmem [shape: f32[32,192], index: 0, kind: input, shape index: {}]
  %s1 = inlined_call_operand.vmem [shape: f32[96,32], index: 1, kind: input, shape index: {}]
  %s2 = inlined_call_operand.vmem [shape: f32[96,1], index: 2, kind: input, shape index: {}]
  %s3 = inlined_call_operand.hbm [shape: f32[2,32], index: 3, kind: output, shape index: {}]
  %s4 = sld [smem:[#allocation0]]
  $region22: #{cross_attention_block.1} parent=0
    _
  %s6 = ssub.s32 1, %s4
  %s7 = scalar_select 0, %s6, %s4
  $region1: #{cross_attention_block.1} parent=0
    #allocation2 [shape = 'u8[1024]{0}', space=vmem, size = 0x400, scoped, tag = 'output window, operand 0, single buffered']
    #allocation3 [shape = 's32[1]{0}', space=sflag, size = 0x4, scoped, tag = 'scoped memory for cross_attention_block.1']
    %8 = vsyncpa [#allocation3], 0
    // Predicated region
    $region2: #{cross_attention_block.1} parent=1 // pred_check
      _
    $region3: #{cross_attention_block.1} parent=1 // pred_check_branch
      %10 = sbr.rel (0) target = $region5
    $region4: #{cross_attention_block.1} parent=1 // pred_region
      _
    $region5: #{cross_attention_block.1} parent=1 // pred_fallthru
      _
    // Predicated region
    $region6: #{cross_attention_block.1} parent=1 // pred_check
      _
    $region7: #{cross_attention_block.1} parent=1 // pred_check_branch
      %12 = sbr.rel (0) target = $region9
    $region8: #{cross_attention_block.1} parent=1 // pred_region
      _
    $region9: #{cross_attention_block.1} parent=1 // pred_fallthru
      _
    // Predicated region
    $region10: #{cross_attention_block.1} parent=1 // pred_check
      _
    $region11: #{cross_attention_block.1} parent=1 // pred_check_branch
      %14 = sbr.rel (0) target = $region13
    $region12: #{cross_attention_block.1} parent=1 // pred_region
      _
    $region13: #{cross_attention_block.1} parent=1 // pred_fallthru
      _
    %v15 = vld [vmem:[%s1] sm:$0xff]
    %v16 = vld [vmem:[%s1 + $0x8] sm:$0xff]
    %v17 = vld [vmem:[%s1 + $0x10] sm:$0xff]
    %v18 = vld [vmem:[%s1 + $0x18] sm:$0xff]
    %v19 = vld [vmem:[%s1 + $0x20] sm:$0xff]
    %v20 = vld [vmem:[%s1 + $0x28] sm:$0xff]
    %v21 = vld [vmem:[%s1 + $0x30] sm:$0xff]
    %v22 = vld [vmem:[%s1 + $0x38] sm:$0xff]
    %v23 = vld [vmem:[%s1 + $0x40] sm:$0xff]
    %v24 = vld [vmem:[%s1 + $0x48] sm:$0xff]
    %v25 = vld [vmem:[%s1 + $0x50] sm:$0xff]
    %v26 = vld [vmem:[%s1 + $0x58] sm:$0xff]
    %v27 = vld [vmem:[%s0] sm:$0xff]
    %v28 = vld [vmem:[%s0 + $0x8] sm:$0xff]
    %v29 = vld [vmem:[%s0 + $0x10] sm:$0xff]
    %v30 = vld [vmem:[%s0 + $0x18] sm:$0xff]
    %v31 = vld [vmem:[%s0 + $0x20] sm:$0xff]
    %v32 = vld [vmem:[%s0 + $0x28] sm:$0xff]
    %v33 = vld [vmem:[%s0 + $0x30] sm:$0xff]
    %v34 = vld [vmem:[%s0 + $0x38] sm:$0xff]
    %v35 = vld [vmem:[%s2] sm:$0xff]
    %v36 = vld [vmem:[%s2 + $0x8] sm:$0xff]
    %v37 = vld [vmem:[%s2 + $0x10] sm:$0xff]
    %v38 = vld [vmem:[%s2 + $0x18] sm:$0xff]
    %v39 = vld [vmem:[%s2 + $0x20] sm:$0xff]
    %v40 = vld [vmem:[%s2 + $0x28] sm:$0xff]
    %v41 = vld [vmem:[%s2 + $0x30] sm:$0xff]
    %v42 = vld [vmem:[%s2 + $0x38] sm:$0xff]
    %v43 = vld [vmem:[%s2 + $0x40] sm:$0xff]
    %v44 = vld [vmem:[%s2 + $0x48] sm:$0xff]
    %v45 = vld [vmem:[%s2 + $0x50] sm:$0xff]
    %v46 = vld [vmem:[%s2 + $0x58] sm:$0xff]
    %48 = vset.pattern.permute.xlu0 0
    %49 = vperm.xlu0 %48, %v35
    %v50 = vpop.permute.xlu0 %49
    %53 = vset.pattern.permute.xlu0 0
    %54 = vperm.xlu0 %53, %v36
    %v55 = vpop.permute.xlu0 %54
    %58 = vset.pattern.permute.xlu0 0
    %59 = vperm.xlu0 %58, %v37
    %v60 = vpop.permute.xlu0 %59
    %63 = vset.pattern.permute.xlu0 0
    %64 = vperm.xlu0 %63, %v38
    %v65 = vpop.permute.xlu0 %64
    %68 = vset.pattern.permute.xlu0 0
    %69 = vperm.xlu0 %68, %v39
    %v70 = vpop.permute.xlu0 %69
    %73 = vset.pattern.permute.xlu0 0
    %74 = vperm.xlu0 %73, %v40
    %v75 = vpop.permute.xlu0 %74
    %78 = vset.pattern.permute.xlu0 0
    %79 = vperm.xlu0 %78, %v41
    %v80 = vpop.permute.xlu0 %79
    %83 = vset.pattern.permute.xlu0 0
    %84 = vperm.xlu0 %83, %v42
    %v85 = vpop.permute.xlu0 %84
    %88 = vset.pattern.permute.xlu0 0
    %89 = vperm.xlu0 %88, %v43
    %v90 = vpop.permute.xlu0 %89
    %93 = vset.pattern.permute.xlu0 0
    %94 = vperm.xlu0 %93, %v44
    %v95 = vpop.permute.xlu0 %94
    %98 = vset.pattern.permute.xlu0 0
    %99 = vperm.xlu0 %98, %v45
    %v100 = vpop.permute.xlu0 %99
    %103 = vset.pattern.permute.xlu0 0
    %104 = vperm.xlu0 %103, %v46
    %v105 = vpop.permute.xlu0 %104
    %vm107 = vcmask 261120
    %v109 = vsel %vm107, %v15, 0
    %v112 = vsel %vm107, %v16, 0
    %v115 = vsel %vm107, %v17, 0
    %v118 = vsel %vm107, %v18, 0
    %v121 = vsel %vm107, %v19, 0
    %v124 = vsel %vm107, %v20, 0
    %v127 = vsel %vm107, %v21, 0
    %v130 = vsel %vm107, %v22, 0
    %v133 = vsel %vm107, %v23, 0
    %v136 = vsel %vm107, %v24, 0
    %v139 = vsel %vm107, %v25, 0
    %v142 = vsel %vm107, %v26, 0
    %144 = vmatprep.subr.mxu0 0.0
    %145 = vmatpush1.msra.mxu0 0.0
    %146 = vmatprep.subr.mxu0 0.0
    %147 = vmatpush1.msra.mxu0 0.0
    %148 = vmatprep.subr.mxu0 0.0
    %149 = vmatpush1.msra.mxu0 0.0
    %150 = vmatprep.subr.mxu0 0.0
    %151 = vmatpush1.msra.mxu0 0.0
    %152 = vmatprep.subr.mxu0 0.0
    %153 = vmatpush1.msra.mxu0 0.0
    %154 = vmatprep.subr.mxu0 0.0
    %155 = vmatpush1.msra.mxu0 0.0
    %156 = vmatprep.subr.mxu0 0.0
    %157 = vmatpush1.msra.mxu0 0.0
    %158 = vmatprep.subr.mxu0 0.0
    %159 = vmatpush1.msra.mxu0 0.0
    %160 = vmatprep.subr.mxu0 0.0
    %161 = vmatpush1.msra.mxu0 0.0
    %162 = vmatprep.subr.mxu0 0.0
    %163 = vmatpush1.msra.mxu0 0.0
    %164 = vmatprep.subr.mxu0 0.0
    %165 = vmatpush1.msra.mxu0 0.0
    %166 = vmatprep.subr.mxu0 0.0
    %167 = vmatpush1.msra.mxu0 0.0
    %168 = vmatprep.subr.mxu0 %v34
    %169 = vmatpush1.msra.mxu0 %v33
    %170 = vmatprep.subr.mxu0 %v32
    %171 = vmatpush1.msra.mxu0 %v31
    %172 = vmatprep.subr.mxu0 %v30
    %173 = vmatpush1.msra.mxu0 %v29
    %174 = vmatprep.subr.mxu0 %v28
    %175 = vmatpush1.msra.mxu0 %v27
    %176 = vmatprep.subr.mxu0 0.0
    %177 = vmatpush2.msra.mxu0 0.0
    %178 = vmatprep.subr.mxu0 0.0
    %179 = vmatpush2.msra.mxu0 0.0
    %180 = vmatprep.subr.mxu0 0.0
    %181 = vmatpush2.msra.mxu0 0.0
    %182 = vmatprep.subr.mxu0 0.0
    %183 = vmatpush2.msra.mxu0 0.0
    %184 = vmatprep.subr.mxu0 0.0
    %185 = vmatpush2.msra.mxu0 0.0
    %186 = vmatprep.subr.mxu0 0.0
    %187 = vmatpush2.msra.mxu0 0.0
    %188 = vmatprep.subr.mxu0 0.0
    %189 = vmatpush2.msra.mxu0 0.0
    %190 = vmatprep.subr.mxu0 0.0
    %191 = vmatpush2.msra.mxu0 0.0
    %192 = vmatprep.subr.mxu0 0.0
    %193 = vmatpush2.msra.mxu0 0.0
    %194 = vmatprep.subr.mxu0 0.0
    %195 = vmatpush2.msra.mxu0 0.0
    %196 = vmatprep.subr.mxu0 0.0
    %197 = vmatpush2.msra.mxu0 0.0
    %198 = vmatprep.subr.mxu0 0.0
    %199 = vmatpush2.msra.mxu0 0.0
    %200 = vmatprep.subr.mxu0 0.0
    %201 = vmatpush2.msra.mxu0 0.0
    %202 = vmatprep.subr.mxu0 0.0
    %203 = vmatpush2.msra.mxu0 0.0
    %204 = vmatprep.subr.mxu0 0.0
    %205 = vmatpush2.msra.mxu0 0.0
    %206 = vmatprep.subr.mxu0 0.0
    %207 = vmatpush2.msra.mxu0 0.0
    %208 = vmatprep.mubr.f32.mxu0 0.0
    %209 = vmatmul.mubr.f32.gmra.mxu0 %v109
    %v210 = vpop.f32.mrf.mxu0
    %v211 = vadd.f32 %v50, %v210
    %v212 = vpop.f32.mrf.mxu0
    %213 = vmatprep.mubr.f32.mxu0 0.0
    %214 = vmatmul.mubr.f32.gmra.mxu0 %v112
    %v215 = vpop.f32.mrf.mxu0
    %v216 = vadd.f32 %v55, %v215
    %v217 = vpop.f32.mrf.mxu0
    %218 = vmatprep.mubr.f32.mxu0 0.0
    %219 = vmatmul.mubr.f32.gmra.mxu0 %v115
    %v220 = vpop.f32.mrf.mxu0
    %v221 = vadd.f32 %v60, %v220
    %v222 = vpop.f32.mrf.mxu0
    %223 = vmatprep.mubr.f32.mxu0 0.0
    %224 = vmatmul.mubr.f32.gmra.mxu0 %v118
    %v225 = vpop.f32.mrf.mxu0
    %v226 = vadd.f32 %v65, %v225
    %v227 = vpop.f32.mrf.mxu0
    %228 = vmatprep.mubr.f32.mxu0 0.0
    %229 = vmatmul.mubr.f32.gmra.mxu0 %v121
    %v230 = vpop.f32.mrf.mxu0
    %v231 = vpop.f32.mrf.mxu0
    %v232 = vadd.f32 %v70, %v231
    %233 = vmatprep.mubr.f32.mxu0 0.0
    %234 = vmatmul.mubr.f32.gmra.mxu0 %v124
    %v235 = vpop.f32.mrf.mxu0
    %v236 = vpop.f32.mrf.mxu0
    %v237 = vadd.f32 %v75, %v236
    %238 = vmatprep.mubr.f32.mxu0 0.0
    %239 = vmatmul.mubr.f32.gmra.mxu0 %v127
    %v240 = vpop.f32.mrf.mxu0
    %v241 = vpop.f32.mrf.mxu0
    %v242 = vadd.f32 %v80, %v241
    %243 = vmatprep.mubr.f32.mxu0 0.0
    %244 = vmatmul.mubr.f32.gmra.mxu0 %v130
    %v245 = vpop.f32.mrf.mxu0
    %v246 = vpop.f32.mrf.mxu0
    %v247 = vadd.f32 %v85, %v246
    %248 = vmatprep.mubr.f32.mxu0 0.0
    %249 = vmatmul.mubr.f32.gmra.mxu0 %v133
    %v250 = vpop.f32.mrf.mxu0
    %v251 = vpop.f32.mrf.mxu0
    %v252 = vadd.f32 %v90, %v251
    %253 = vmatprep.mubr.f32.mxu0 0.0
    %254 = vmatmul.mubr.f32.gmra.mxu0 %v136
    %v255 = vpop.f32.mrf.mxu0
    %v256 = vpop.f32.mrf.mxu0
    %v257 = vadd.f32 %v95, %v256
    %258 = vmatprep.mubr.f32.mxu0 0.0
    %259 = vmatmul.mubr.f32.gmra.mxu0 %v139
    %v260 = vpop.f32.mrf.mxu0
    %v261 = vpop.f32.mrf.mxu0
    %v262 = vadd.f32 %v100, %v261
    %263 = vmatprep.mubr.f32.mxu0 0.0
    %264 = vmatmul.mubr.f32.gmra.mxu0 %v142
    %v265 = vpop.f32.mrf.mxu0
    %v266 = vpop.f32.mrf.mxu0
    %v267 = vadd.f32 %v105, %v266
    %268 = vdwg.mxu0
    %v269 = vmul.f32 %v211, %v232
    %v270 = vmul.f32 %v216, %v237
    %v271 = vmul.f32 %v221, %v242
    %v272 = vmul.f32 %v226, %v247
    %vm273 = vcmask 523264
    %v274 = vsel %vm273, %v269, 0.0
    %v275 = vsel %vm273, %v270, 0.0
    %v276 = vadd.f32 %v274, %v275
    %v277 = vsel %vm273, %v271, 0.0
    %v278 = vadd.f32 %v276, %v277
    %v279 = vsel %vm273, %v272, 0.0
    %v280 = vadd.f32 %v278, %v279
    %v281 = vrot.slane %v280, 4
    %v282 = vadd.f32 %v280, %v281
    %v283 = vrot.slane %v282, 2
    %v284 = vadd.f32 %v282, %v283
    %v285 = vrot.slane %v284, 1
    %v286 = vadd.f32 %v284, %v285
    %v287 = vmul.f32 %v286, 0.17677669
    %v288 = vsel %vm273, %v287, -inf
    %289 = vmax.xlane.f32.xlu0 %v288
    %v290 = vpop.xlane.xlu0 %289
    %v291 = vsub.f32 %v287, %v290
    %v292 = vmul.f32 %v291, 1.442695
    %v293 = vpow.pop %v292
    %v294 = vsel %vm273, %v293, 0.0
    %295 = vadd.xlane.f32.xlu0 %v294
    %v296 = vpop.xlane.xlu0 %295
    %v297 = vrcp.pop %v296
    %302 = vrot.lane.b32.xlu0 %v232, 64
    %v303 = vpop.permute.xlu0 %302
    %304 = vrot.lane.b32.xlu0 %v237, 64
    %v305 = vpop.permute.xlu0 %304
    %306 = vrot.lane.b32.xlu0 %v242, 64
    %v307 = vpop.permute.xlu0 %306
    %308 = vrot.lane.b32.xlu0 %v247, 64
    %v309 = vpop.permute.xlu0 %308
    %v314 = vmul.f32 %v211, %v303
    %v315 = vmul.f32 %v216, %v305
    %v316 = vmul.f32 %v221, %v307
    %v317 = vmul.f32 %v226, %v309
    %vm318 = vcmask 1048064
    %v319 = vsel %vm318, %v314, 0.0
    %v320 = vsel %vm318, %v315, 0.0
    %v321 = vadd.f32 %v319, %v320
    %v322 = vsel %vm318, %v316, 0.0
    %v323 = vadd.f32 %v321, %v322
    %v324 = vsel %vm318, %v317, 0.0
    %v325 = vadd.f32 %v323, %v324
    %v326 = vrot.slane %v325, 4
    %v327 = vadd.f32 %v325, %v326
    %v328 = vrot.slane %v327, 2
    %v329 = vadd.f32 %v327, %v328
    %v330 = vrot.slane %v329, 1
    %v331 = vadd.f32 %v329, %v330
    %v332 = vmul.f32 %v331, 0.17677669
    %v333 = vsel %vm318, %v332, -inf
    %334 = vmax.xlane.f32.xlu0 %v333
    %v335 = vpop.xlane.xlu0 %334
    %v336 = vsub.f32 %v332, %v335
    %v337 = vmul.f32 %v336, 1.442695
    %v338 = vpow.pop %v337
    %340 = vrot.lane.b32.xlu0 %v338, 64
    %v341 = vpop.permute.xlu0 %340
    %v343 = vsel %vm273, %v341, 0.0
    %344 = vadd.xlane.f32.xlu0 %v343
    %v345 = vpop.xlane.xlu0 %344
    %v346 = vrcp.pop %v345
    %vm347 = vcmask 1040384
    %v348 = vsel %vm347, %v293, %v341
    %v349 = vsel %vm347, %v297, %v346
    %v351 = vsel %vm273, %v348, 0
    %v354 = vsel %vm273, %v252, 0
    %v357 = vsel %vm273, %v257, 0
    %v360 = vsel %vm273, %v262, 0
    %v363 = vsel %vm273, %v267, 0
    %365 = vmatprep.subr.mxu0 0.0
    %366 = vmatpush1.xpose.msra.mxu0 0.0
    %367 = vmatprep.subr.mxu0 0.0
    %368 = vmatpush1.xpose.msra.mxu0 0.0
    %369 = vmatprep.subr.mxu0 0.0
    %370 = vmatpush1.xpose.msra.mxu0 0.0
    %371 = vmatprep.subr.mxu0 0.0
    %372 = vmatpush1.xpose.msra.mxu0 0.0
    %373 = vmatprep.subr.mxu0 0.0
    %374 = vmatpush1.xpose.msra.mxu0 0.0
    %375 = vmatprep.subr.mxu0 0.0
    %376 = vmatpush1.xpose.msra.mxu0 0.0
    %377 = vmatprep.subr.mxu0 0.0
    %378 = vmatpush1.xpose.msra.mxu0 0.0
    %379 = vmatprep.subr.mxu0 0.0
    %380 = vmatpush1.xpose.msra.mxu0 0.0
    %381 = vmatprep.subr.mxu0 0.0
    %382 = vmatpush1.xpose.msra.mxu0 0.0
    %383 = vmatprep.subr.mxu0 0.0
    %384 = vmatpush1.xpose.msra.mxu0 0.0
    %385 = vmatprep.subr.mxu0 0.0
    %386 = vmatpush1.xpose.msra.mxu0 0.0
    %387 = vmatprep.subr.mxu0 0.0
    %388 = vmatpush1.xpose.msra.mxu0 0.0
    %389 = vmatprep.subr.mxu0 0.0
    %390 = vmatpush1.xpose.msra.mxu0 %v363
    %391 = vmatprep.subr.mxu0 0.0
    %392 = vmatpush1.xpose.msra.mxu0 %v360
    %393 = vmatprep.subr.mxu0 0.0
    %394 = vmatpush1.xpose.msra.mxu0 %v357
    %395 = vmatprep.subr.mxu0 0.0
    %396 = vmatpush1.xpose.msra.mxu0 %v354
    %397 = vmatprep.subr.mxu0 0.0
    %398 = vmatpush2.xpose.msra.mxu0 0.0
    %399 = vmatprep.subr.mxu0 0.0
    %400 = vmatpush2.xpose.msra.mxu0 0.0
    %401 = vmatprep.subr.mxu0 0.0
    %402 = vmatpush2.xpose.msra.mxu0 0.0
    %403 = vmatprep.subr.mxu0 0.0
    %404 = vmatpush2.xpose.msra.mxu0 0.0
    %405 = vmatprep.subr.mxu0 0.0
    %406 = vmatpush2.xpose.msra.mxu0 0.0
    %407 = vmatprep.subr.mxu0 0.0
    %408 = vmatpush2.xpose.msra.mxu0 0.0
    %409 = vmatprep.subr.mxu0 0.0
    %410 = vmatpush2.xpose.msra.mxu0 0.0
    %411 = vmatprep.subr.mxu0 0.0
    %412 = vmatpush2.xpose.msra.mxu0 0.0
    %413 = vmatprep.subr.mxu0 0.0
    %414 = vmatpush2.xpose.msra.mxu0 0.0
    %415 = vmatprep.subr.mxu0 0.0
    %416 = vmatpush2.xpose.msra.mxu0 0.0
    %417 = vmatprep.subr.mxu0 0.0
    %418 = vmatpush2.xpose.msra.mxu0 0.0
    %419 = vmatprep.subr.mxu0 0.0
    %420 = vmatpush2.xpose.msra.mxu0 0.0
    %421 = vmatprep.subr.mxu0 0.0
    %422 = vmatpush2.xpose.msra.mxu0 0.0
    %423 = vmatprep.subr.mxu0 0.0
    %424 = vmatpush2.xpose.msra.mxu0 0.0
    %425 = vmatprep.subr.mxu0 0.0
    %426 = vmatpush2.xpose.msra.mxu0 0.0
    %427 = vmatprep.subr.mxu0 0.0
    %428 = vmatpush2.xpose.msra.mxu0 0.0
    %429 = vmatprep.mubr.f32.mxu0 0.0
    %430 = vmatmul.mubr.f32.gmra.mxu0 %v351
    %v431 = vpop.f32.mrf.mxu0
    %v432 = vadd.f32 0.0, %v431
    %v433 = vpop.f32.mrf.mxu0
    %434 = vdwg.mxu0
    %436 = vset.pattern.permute.xlu0 0
    %437 = vperm.xlu0 %436, %v349
    %v438 = vpop.permute.xlu0 %437
    %v440 = vmul.f32 %v432, %v438
    %vm441 = vcmask 254976
    %442 = vst.msk [vmem:[#allocation2] sm:$0x3] %vm441, %v440
    // Predicated region
    $region14: #{cross_attention_block.1} parent=1 // pred_check
      _
    $region15: #{cross_attention_block.1} parent=1 // pred_check_branch
      %444 = sbr.rel (0) target = $region17
    $region16: #{cross_attention_block.1} parent=1 // pred_region
      %s446 = ssub.s32 32, 32
      %447 = vsyncadd [#allocation3], %s446
      %s449 = sshll.u32 [#allocation2], 4
      %s450 = int_to_ptr.vmem [resolvable:$true] %s449
      %452 = dma.vmem_to_hbm [thread:$0]  %s450, 32, %s3, [#allocation3]
    $region17: #{cross_attention_block.1} parent=1 // pred_fallthru
      _
    // Predicated region
    $region18: #{cross_attention_block.1} parent=1 // pred_check
      _
    $region19: #{cross_attention_block.1} parent=1 // pred_check_branch
      %454 = sbr.rel (0) target = $region21
    $region20: #{cross_attention_block.1} parent=1 // pred_region
      %455 = dma.done [#allocation3], 32
    $region21: #{cross_attention_block.1} parent=1 // pred_fallthru
      _
    %456 = vsyncpa [#allocation3], 1

</llo_original>
